<compile_context>
chip_gen: v5e
topology: v5e:2x2
jax: 0.10.0
libtpu: 0.0.40
codegen_flags: <defaults>
</compile_context>

<pallas_src>
import functools

import jax
import jax.numpy as jnp
from jax.experimental import pallas as pl
from jax.experimental.pallas import tpu as pltpu


def _residual_pw_conv_kernel(x_ref, w_ref, b_ref, o_ref, *, residual_folded):
    """One (batch, time-tile) block in NCT layout.

    x_ref: (1, C, tT) f32   channels on sublanes, time on lanes
    w_ref: (C, C)           f32 (= W + I, residual folded) or bf16 (= W)
    b_ref: (C, 1)     f32   bias column, broadcast over the time/lane axis
    o_ref: (1, C, tT)
    """
    x = x_ref[0]                                              # (C, tT) f32
    # pointwise conv == channel matmul on the MXU; always accumulate in f32
    y = jnp.dot(w_ref[...], x.astype(w_ref.dtype),
                preferred_element_type=jnp.float32)
    y = y + b_ref[...]                                        # bias over time
    if not residual_folded:
        y = y + x                  # residual kept exact in f32 (bf16-matmul path)
    o_ref[0] = y.astype(o_ref.dtype)


def _pick_time_tile(t_pad, target, batch, c, w_itemsize, vmem_budget_bytes):
    """Pick a lane-dense time tile (multiple of 128 dividing t_pad).

    Clamps the target to (a) a multiple of 128, (b) the VMEM working-set
    budget, and (c) >= 2 time tiles when the batch alone can't give 2 grid
    steps (keeps both v7x TensorCores fed).  Returns (tile, vmem_bytes_needed).
    """
    n = t_pad // 128
    # conservative working set: x + o double-buffered (f32), weight + bias
    # budgeted at 2 buffers in case single-buffering is unavailable.
    fixed = 2 * c * c * w_itemsize + 2 * 8 * 128 * 4
    per_t = 2 * 2 * c * 4                      # bytes per time element (x + o)
    m_budget = max(1, int((vmem_budget_bytes - fixed) // (per_t * 128)))
    m_target = max(1, min(n, max(1, target // 128), m_budget))
    if batch < 2 and n >= 2:
        m_target = max(1, min(m_target, n // 2))
    for m in range(m_target, 0, -1):
        if n % m == 0:
            tile = 128 * m
            return tile, fixed + per_t * tile
    return 128, fixed + per_t * 128


def _build_residual_call(B, C, t_pad, tT, out_dtype, residual_folded,
                         vmem_limit_bytes, single_buffer_weights):
    const_kwargs = {}
    if single_buffer_weights and hasattr(pl, "Buffered"):
        # resident weight/bias: no need for double buffering, reclaim VMEM
        const_kwargs = dict(pipeline_mode=pl.Buffered(1))
    kernel = functools.partial(_residual_pw_conv_kernel,
                               residual_folded=residual_folded)
    return pl.pallas_call(
        kernel,
        out_shape=jax.ShapeDtypeStruct((B, C, t_pad), out_dtype),
        grid_spec=pl.GridSpec(
            grid=(B, t_pad // tT),
            in_specs=[
                pl.BlockSpec((1, C, tT), lambda b, t: (b, 0, t)),          # x tile
                pl.BlockSpec((C, C), lambda b, t: (0, 0), **const_kwargs),  # weight
                pl.BlockSpec((C, 1), lambda b, t: (0, 0), **const_kwargs),  # bias
            ],
            out_specs=pl.BlockSpec((1, C, tT), lambda b, t: (b, 0, t)),
        ),
        compiler_params=pltpu.CompilerParams(
            dimension_semantics=("parallel", "parallel"),
            vmem_limit_bytes=vmem_limit_bytes),
    )


def residual_forward(x_nct, weight, bias, *, time_tile: int = 2048,
                     use_bf16_matmul: bool = False,
                     vmem_budget_bytes: int = 48 << 20):
    """Residual(Conv1d(C, C, 1)) forward, NCT layout.

    x_nct : (B, C, T)         float32, PyTorch NCT layout
    weight: (C_out, C_in, 1)  PyTorch Conv1d weight
    bias  : (C_out,)
    time_tile: target lane-axis tile (clamped to a multiple of 128 and to the
               VMEM budget).
    use_bf16_matmul: run the conv matmul with bf16 operands (f32 accumulate,
               f32 residual add) — ~3x less MXU work; only matters when the
               kernel is not purely HBM-bound (v5e, or C >= ~512).
    """
    B, C, T = x_nct.shape
    w = weight[:, :, 0]                               # (C_out, C_in), no transpose
    if use_bf16_matmul:
        w_k = w.astype(jnp.bfloat16)
        residual_folded = False                       # keep skip path in f32
    else:
        # fold the residual into the weight: (W + I) @ x == W @ x + x
        w_k = w + jnp.eye(C, dtype=w.dtype)
        residual_folded = True
    b_col = bias.reshape(C, 1).astype(jnp.float32)

    t_pad = 128 * pl.cdiv(T, 128)
    tT, vmem_needed = _pick_time_tile(t_pad, time_tile, B, C,
                                      w_k.dtype.itemsize, vmem_budget_bytes)
    # explicit scoped-VMEM limit: >= default everywhere, <= v7x physical (64 MiB)
    vmem_limit = int(min(max(vmem_needed + (4 << 20), 32 << 20), 56 << 20))

    x_in = (x_nct if t_pad == T
            else jnp.pad(x_nct, ((0, 0), (0, 0), (0, t_pad - T))))

    def run(single_buffer_weights):
        call = _build_residual_call(B, C, t_pad, tT, x_nct.dtype,
                                    residual_folded, vmem_limit,
                                    single_buffer_weights)
        return call(x_in, w_k, b_col)

    try:
        out = run(True)
    except Exception:
        # pipeline_mode=pl.Buffered(1) not supported by this JAX/Mosaic build:
        # fall back to default double-buffered resident blocks (still correct).
        out = run(False)

    return out if t_pad == T else out[:, :, :T]


def _reference(x, weight, bias):
    return jnp.einsum("oi,bit->bot", weight[:, :, 0], x) + bias[None, :, None] + x


if __name__ == "__main__":
    key = jax.random.PRNGKey(0)
    kx, kw, kb, kx2, kw2, kb2 = jax.random.split(key, 6)

    # --- Test 1: f32 path (residual folded into W + I), multi-tile grid -----
    B, C, T = 2, 128, 512
    x = jax.random.normal(kx, (B, C, T), dtype=jnp.float32)
    weight = jax.random.normal(kw, (C, C, 1), dtype=jnp.float32) * 0.1
    bias = jax.random.normal(kb, (C,), dtype=jnp.float32) * 0.1

    out = residual_forward(x, weight, bias, time_tile=256)   # grid (2, 2)
    out = jax.block_until_ready(out)
    ref = _reference(x, weight, bias)
    assert out.shape == (B, C, T)
    err1 = float(jnp.max(jnp.abs(out - ref)))
    assert jnp.allclose(out, ref, atol=2e-3, rtol=2e-3), err1

    # --- Test 2: bf16-matmul path, ragged T (padded), B=1 forces >=2 tiles --
    B2, C2, T2 = 1, 64, 200
    x2 = jax.random.normal(kx2, (B2, C2, T2), dtype=jnp.float32)
    weight2 = jax.random.normal(kw2, (C2, C2, 1), dtype=jnp.float32) * 0.1
    bias2 = jax.random.normal(kb2, (C2,), dtype=jnp.float32) * 0.1

    out2 = residual_forward(x2, weight2, bias2, use_bf16_matmul=True)
    out2 = jax.block_until_ready(out2)
    ref2 = _reference(x2, weight2, bias2)
    assert out2.shape == (B2, C2, T2)
    err2 = float(jnp.max(jnp.abs(out2 - ref2)))
    # bf16 operands on the conv path, f32 residual -> bf16-level tolerance
    assert jnp.allclose(out2, ref2, atol=2e-2, rtol=2e-2), err2

    print("KERNEL_OK")
</pallas_src>

<mosaic_0001>
module attributes {stable_mosaic.version = 11 : i64} {
  func.func @_residual_pw_conv_kernel(%arg0: i32, %arg1: i32, %arg2: memref<1x128x256xf32, #tpu.memory_space<vmem>>, %arg3: memref<128x128xf32, #tpu.memory_space<vmem>>, %arg4: memref<128x1xf32, #tpu.memory_space<vmem>>, %arg5: memref<1x128x256xf32, #tpu.memory_space<vmem>>) attributes {dimension_semantics = [#tpu.dimension_semantics<parallel>, #tpu.dimension_semantics<parallel>], iteration_bounds = array<i64: 2, 2>, scalar_prefetch = 0 : i64, scratch_operands = 0 : i64, tpu.core_type = #tpu.core_type<tc>, window_params = [{transform_indices = @transform_0, window_bounds = array<i64: 1, 128, 256>}, {pipeline_mode = #tpu.pipeline_mode<synchronous>, transform_indices = @transform_1, window_bounds = array<i64: 128, 128>}, {pipeline_mode = #tpu.pipeline_mode<synchronous>, transform_indices = @transform_2, window_bounds = array<i64: 128, 1>}, {transform_indices = @transform_3, window_bounds = array<i64: 1, 128, 256>}]} {
    %c0 = arith.constant 0 : index
    %c0_0 = arith.constant 0 : index
    %c0_1 = arith.constant 0 : index
    %0 = vector.load %arg2[%c0, %c0_0, %c0_1] : memref<1x128x256xf32, #tpu.memory_space<vmem>>, vector<1x128x256xf32>
    %1 = vector.shape_cast %0 : vector<1x128x256xf32> to vector<128x256xf32>
    %c0_2 = arith.constant 0 : index
    %c0_3 = arith.constant 0 : index
    %2 = vector.load %arg3[%c0_2, %c0_3] : memref<128x128xf32, #tpu.memory_space<vmem>>, vector<128x128xf32>
    %cst = arith.constant dense<0.000000e+00> : vector<128x256xf32>
    %3 = tpu.matmul %2, %1, %cst {dimension_numbers = #tpu.dot_dimension_numbers<[1], [0], [0], [1], [0, 0, 1, 1], [], []>} : vector<128x128xf32>, vector<128x256xf32>, vector<128x256xf32> -> vector<128x256xf32>
    %c0_4 = arith.constant 0 : index
    %c0_5 = arith.constant 0 : index
    %4 = vector.load %arg4[%c0_4, %c0_5] : memref<128x1xf32, #tpu.memory_space<vmem>>, vector<128x1xf32>
    %5 = vector.broadcast %4 : vector<128x1xf32> to vector<128x256xf32>
    %6 = arith.addf %3, %5 : vector<128x256xf32>
    %c0_6 = arith.constant 0 : index
    %c0_7 = arith.constant 0 : index
    %c0_8 = arith.constant 0 : index
    %7 = vector.load %arg5[%c0_6, %c0_7, %c0_8] : memref<1x128x256xf32, #tpu.memory_space<vmem>>, vector<1x128x256xf32>
    %8 = vector.shape_cast %7 : vector<1x128x256xf32> to vector<128x256xf32>
    %9 = vector.shape_cast %6 : vector<128x256xf32> to vector<1x128x256xf32>
    tpu.vector_store %arg5[%c0_6, %c0_7, %c0_8], %9 {strides = array<i32>} : memref<1x128x256xf32, #tpu.memory_space<vmem>>, vector<1x128x256xf32>,
    return
  }
  func.func @transform_0(%arg0: i32, %arg1: i32) -> (i32, i32, i32) {
    %c0_i32 = arith.constant 0 : i32
    %c0_i32_0 = arith.constant 0 : i32
    return %arg0, %c0_i32, %arg1 : i32, i32, i32
  }
  func.func @transform_1(%arg0: i32, %arg1: i32) -> (i32, i32) {
    %c0_i32 = arith.constant 0 : i32
    %c0_i32_0 = arith.constant 0 : i32
    %c0_i32_1 = arith.constant 0 : i32
    return %c0_i32, %c0_i32_0 : i32, i32
  }
  func.func @transform_2(%arg0: i32, %arg1: i32) -> (i32, i32) {
    %c0_i32 = arith.constant 0 : i32
    %c0_i32_0 = arith.constant 0 : i32
    %c0_i32_1 = arith.constant 0 : i32
    return %c0_i32, %c0_i32_0 : i32, i32
  }
  func.func @transform_3(%arg0: i32, %arg1: i32) -> (i32, i32, i32) {
    %c0_i32 = arith.constant 0 : i32
    %c0_i32_0 = arith.constant 0 : i32
    return %arg0, %c0_i32, %arg1 : i32, i32, i32
  }
}

module attributes {stable_mosaic.version = 11 : i64} {
  func.func @_residual_pw_conv_kernel(%arg0: i32, %arg1: i32, %arg2: memref<1x128x256xf32, #tpu.memory_space<vmem>>, %arg3: memref<128x128xf32, #tpu.memory_space<vmem>>, %arg4: memref<128x1xf32, #tpu.memory_space<vmem>>, %arg5: memref<1x128x256xf32, #tpu.memory_space<vmem>>) attributes {dimension_semantics = [#tpu.dimension_semantics<parallel>, #tpu.dimension_semantics<parallel>], iteration_bounds = array<i64: 2, 2>, scalar_prefetch = 0 : i64, scratch_operands = 0 : i64, tpu.core_type = #tpu.core_type<tc>, window_params = [{transform_indices = @transform_0, window_bounds = array<i64: 1, 128, 256>}, {pipeline_mode = #tpu.pipeline_mode<synchronous>, transform_indices = @transform_1, window_bounds = array<i64: 128, 128>}, {pipeline_mode = #tpu.pipeline_mode<synchronous>, transform_indices = @transform_2, window_bounds = array<i64: 128, 1>}, {transform_indices = @transform_3, window_bounds = array<i64: 1, 128, 256>}]} {
    %c0 = arith.constant 0 : index
    %c0_0 = arith.constant 0 : index
    %c0_1 = arith.constant 0 : index
    %0 = vector.load %arg2[%c0, %c0_0, %c0_1] : memref<1x128x256xf32, #tpu.memory_space<vmem>>, vector<1x128x256xf32>
    %1 = vector.shape_cast %0 : vector<1x128x256xf32> to vector<128x256xf32>
    %c0_2 = arith.constant 0 : index
    %c0_3 = arith.constant 0 : index
    %2 = vector.load %arg3[%c0_2, %c0_3] : memref<128x128xf32, #tpu.memory_space<vmem>>, vector<128x128xf32>
    %cst = arith.constant dense<0.000000e+00> : vector<128x256xf32>
    %3 = tpu.matmul %2, %1, %cst {dimension_numbers = #tpu.dot_dimension_numbers<[1], [0], [0], [1], [0, 0, 1, 1], [], []>} : vector<128x128xf32>, vector<128x256xf32>, vector<128x256xf32> -> vector<128x256xf32>
    %c0_4 = arith.constant 0 : index
    %c0_5 = arith.constant 0 : index
    %4 = vector.load %arg4[%c0_4, %c0_5] : memref<128x1xf32, #tpu.memory_space<vmem>>, vector<128x1xf32>
    %5 = vector.broadcast %4 : vector<128x1xf32> to vector<128x256xf32>
    %6 = arith.addf %3, %5 : vector<128x256xf32>
    %c0_6 = arith.constant 0 : index
    %c0_7 = arith.constant 0 : index
    %c0_8 = arith.constant 0 : index
    %7 = vector.load %arg5[%c0_6, %c0_7, %c0_8] : memref<1x128x256xf32, #tpu.memory_space<vmem>>, vector<1x128x256xf32>
    %8 = vector.shape_cast %7 : vector<1x128x256xf32> to vector<128x256xf32>
    %9 = vector.shape_cast %6 : vector<128x256xf32> to vector<1x128x256xf32>
    tpu.vector_store %arg5[%c0_6, %c0_7, %c0_8], %9 {strides = array<i32>} : memref<1x128x256xf32, #tpu.memory_space<vmem>>, vector<1x128x256xf32>,
    return
  }
  func.func @transform_0(%arg0: i32, %arg1: i32) -> (i32, i32, i32) {
    %c0_i32 = arith.constant 0 : i32
    %c0_i32_0 = arith.constant 0 : i32
    return %arg0, %c0_i32, %arg1 : i32, i32, i32
  }
  func.func @transform_1(%arg0: i32, %arg1: i32) -> (i32, i32) {
    %c0_i32 = arith.constant 0 : i32
    %c0_i32_0 = arith.constant 0 : i32
    %c0_i32_1 = arith.constant 0 : i32
    return %c0_i32, %c0_i32_0 : i32, i32
  }
  func.func @transform_2(%arg0: i32, %arg1: i32) -> (i32, i32) {
    %c0_i32 = arith.constant 0 : i32
    %c0_i32_0 = arith.constant 0 : i32
    %c0_i32_1 = arith.constant 0 : i32
    return %c0_i32, %c0_i32_0 : i32, i32
  }
  func.func @transform_3(%arg0: i32, %arg1: i32) -> (i32, i32, i32) {
    %c0_i32 = arith.constant 0 : i32
    %c0_i32_0 = arith.constant 0 : i32
    return %arg0, %c0_i32, %arg1 : i32, i32, i32
  }
}

</mosaic_0001>

<llo_original>
// kernel: tpu_custom_call.1
$region0: #{tpu_custom_call.1}
  #allocation0 [shape = 'u32[]', space=smem, size = 0x4, offset = 0x4, fixed_abs, tag = 'smem constant byte address 0x4 - core index']
  #allocation1 [shape = 'u32[72,128]{1,0:T(1,128)}', space=vmem, size = 0x9000, scoped, tag = 'internal scratch']
  %s0 = inlined_call_operand.hbm [shape: f32[2,128,512], index: 0, kind: input, shape index: {}]
  %s1 = inlined_call_operand.vmem [shape: f32[128,128], index: 1, kind: input, shape index: {}]
  %s2 = inlined_call_operand.vmem [shape: f32[128,1], index: 2, kind: input, shape index: {}]
  %s3 = inlined_call_operand.hbm [shape: f32[2,128,512], index: 3, kind: output, shape index: {}]
  %s4 = sld [smem:[#allocation0]]
  $region49: #{tpu_custom_call.1} parent=0
    _
  %s6 = ssub.s32 1, %s4
  %s7 = scalar_select 0, %s6, %s4
  $region1: #{tpu_custom_call.1} parent=0
    #allocation2 [shape = 'u8[262144]{0}', space=vmem, size = 0x40000, scoped, tag = 'input window, operand 0']
    #allocation3 [shape = 's32[2]{0}', space=sflag, size = 0x8, scoped, tag = 'scoped memory for tpu_custom_call.1']
    #allocation4 [shape = 's32[2]{0}', space=sflag, size = 0x8, scoped, tag = 'scoped memory for tpu_custom_call.1']
    #allocation5 [shape = 'u8[262144]{0}', space=vmem, size = 0x40000, scoped, tag = 'output window, operand 0']
    %8 = vsyncpa [#allocation3], 0
    %s9 = scalar_lea.sflag [#allocation3], 1
    %10 = vsyncpa %s9, 0
    %11 = vsyncpa [#allocation4], 0
    %s12 = scalar_lea.sflag [#allocation4], 1
    %13 = vsyncpa %s12, 0
    loop: start=0, step=1, limit=6
    $region2: #{tpu_custom_call.1} parent=1 // loop_pre_header
      _
    $region3: #{tpu_custom_call.1} parent=1 // loop_header
      %s15 = sphi 0, %s19
      %p16 = scmp.ge.s32.totalorder %s15, 6
      %s22 = sphi 0, %s34
      %s23 = sphi 0, %s30
      %s24 = sphi 0, %s22
      %s25 = sphi 0, %s23
      %s26 = sphi 0, %s24
      %s27 = sphi 0, %s25
      %s39 = sphi 0, %s41
      %s42 = sphi 0, %s39
      %s43 = sphi 0, %s42
      %s59 = sphi 0, %s43
      %s63 = sphi 0, %s63
      %s65 = sphi 0, %s63
      %s66 = sphi 0, %s65
      %s80 = sphi 0, %s66
      %s84 = sphi 0, %s84
      %s86 = sphi 0, %s84
      %s87 = sphi 0, %s86
      %s101 = sphi 0, %s87
      %s109 = sphi 0, %s111
      %s112 = sphi 0, %s109
      %s113 = sphi 0, %s112
      %s129 = sphi 0, %s113
    $region4: #{tpu_custom_call.1} parent=1 // loop_header_branch
      %18 = sbr.rel (%p16) target = $region8
    $region5: #{tpu_custom_call.1} parent=1 // loop_body
      %s20 = ssub.s32 %s15, 1
      %s21 = ssub.s32 %s15, 2
      %s28 = sadd.s32 1, %s23
      %p29 = scmp.ge.s32.totalorder %s28, 2
      %s30 = scalar_select %p29, 0, %s28
      %s31 = sadd.s32 1, %s22
      %s32 = scalar_select %p29, %s31, %s22
      %p33 = scmp.ge.s32.totalorder %s32, 2
      %s34 = scalar_select %p33, 0, %s32
      %s35 = ssub.s32 %s22, %s34
      %s36 = ssub.s32 %s23, %s30
      %s37 = sor.u32 %s35, %s36
      %p38 = scmp.eq.s32.totalorder %s37, 0
      %s40 = sadd.s32 %s39, 1
      %s41 = scalar_select %p38, %s39, %s40
      %p44 = pneg %p38
      %p45 = scmp.eq.s32.totalorder %s15, 3
      %p46 = por %p44, %p45
      %p47 = scmp.ne.s32.totalorder %s39, %s42
      %p48 = scmp.eq.s32.totalorder %s15, 0
      %p49 = por %p47, %p48
      %p50 = scmp.ne.s32.totalorder %s39, %s42
      %p51 = scmp.eq.s32.totalorder %s20, 3
      %p52 = por %p50, %p51
      %p53 = scmp.ne.s32.totalorder %s42, %s43
      %p54 = scmp.eq.s32.totalorder %s20, 0
      %p55 = por %p53, %p54
      %p56 = scmp.ne.s32.totalorder %s42, %s43
      %p57 = scmp.eq.s32.totalorder %s21, 3
      %p58 = por %p56, %p57
      %p60 = scmp.ne.s32.totalorder %s43, %s59
      %p61 = scmp.eq.s32.totalorder %s21, 0
      %p62 = por %p60, %p61
      %s64 = sadd.s32 %s63, 1
      %p67 = scmp.eq.s32.totalorder %s15, 3
      %p68 = scmp.ne.s32.totalorder %s63, %s65
      %p69 = scmp.eq.s32.totalorder %s15, 0
      %p70 = por %p68, %p69
      %p71 = scmp.ne.s32.totalorder %s63, %s65
      %p72 = scmp.eq.s32.totalorder %s20, 3
      %p73 = por %p71, %p72
      %p74 = scmp.ne.s32.totalorder %s65, %s66
      %p75 = scmp.eq.s32.totalorder %s20, 0
      %p76 = por %p74, %p75
      %p77 = scmp.ne.s32.totalorder %s65, %s66
      %p78 = scmp.eq.s32.totalorder %s21, 3
      %p79 = por %p77, %p78
      %p81 = scmp.ne.s32.totalorder %s66, %s80
      %p82 = scmp.eq.s32.totalorder %s21, 0
      %p83 = por %p81, %p82
      %s85 = sadd.s32 %s84, 1
      %p88 = scmp.eq.s32.totalorder %s15, 3
      %p89 = scmp.ne.s32.totalorder %s84, %s86
      %p90 = scmp.eq.s32.totalorder %s15, 0
      %p91 = por %p89, %p90
      %p92 = scmp.ne.s32.totalorder %s84, %s86
      %p93 = scmp.eq.s32.totalorder %s20, 3
      %p94 = por %p92, %p93
      %p95 = scmp.ne.s32.totalorder %s86, %s87
      %p96 = scmp.eq.s32.totalorder %s20, 0
      %p97 = por %p95, %p96
      %p98 = scmp.ne.s32.totalorder %s86, %s87
      %p99 = scmp.eq.s32.totalorder %s21, 3
      %p100 = por %p98, %p99
      %p102 = scmp.ne.s32.totalorder %s87, %s101
      %p103 = scmp.eq.s32.totalorder %s21, 0
      %p104 = por %p102, %p103
      %s105 = ssub.s32 %s22, %s34
      %s106 = ssub.s32 %s23, %s30
      %s107 = sor.u32 %s105, %s106
      %p108 = scmp.eq.s32.totalorder %s107, 0
      %s110 = sadd.s32 %s109, 1
      %s111 = scalar_select %p108, %s109, %s110
      %p114 = pneg %p108
      %p115 = scmp.eq.s32.totalorder %s15, 3
      %p116 = por %p114, %p115
      %p117 = scmp.ne.s32.totalorder %s109, %s112
      %p118 = scmp.eq.s32.totalorder %s15, 0
      %p119 = por %p117, %p118
      %p120 = scmp.ne.s32.totalorder %s109, %s112
      %p121 = scmp.eq.s32.totalorder %s20, 3
      %p122 = por %p120, %p121
      %p123 = scmp.ne.s32.totalorder %s112, %s113
      %p124 = scmp.eq.s32.totalorder %s20, 0
      %p125 = por %p123, %p124
      %p126 = scmp.ne.s32.totalorder %s112, %s113
      %p127 = scmp.eq.s32.totalorder %s21, 3
      %p128 = por %p126, %p127
      %p130 = scmp.ne.s32.totalorder %s113, %s129
      %p131 = scmp.eq.s32.totalorder %s21, 0
      %p132 = por %p130, %p131
      %p133 = scmp.le.s32.totalorder 1, %s15
      %p134 = scmp.lt.s32.totalorder %s15, 5
      %p135 = pnand %p133, %p134
      %p136 = pneg %p135
      // Predicated region
      $region9: #{tpu_custom_call.1} parent=5 // pred_check
        _
      $region10: #{tpu_custom_call.1} parent=5 // pred_check_branch
        %138 = sbr.rel (%p135) target = $region12
      $region11: #{tpu_custom_call.1} parent=5 // pred_region
        %s139 = ssub.s32 %s15, 1
        // Predicated region
        $region13: #{tpu_custom_call.1} parent=11 // pred_check
          %p140 = pneg %p76
        $region14: #{tpu_custom_call.1} parent=11 // pred_check_branch
          %142 = sbr.rel (%p140) target = $region16
        $region15: #{tpu_custom_call.1} parent=11 // pred_region
          _
        $region16: #{tpu_custom_call.1} parent=11 // pred_fallthru
          _
        // Predicated region
        $region17: #{tpu_custom_call.1} parent=11 // pred_check
          %p143 = pneg %p97
        $region18: #{tpu_custom_call.1} parent=11 // pred_check_branch
          %145 = sbr.rel (%p143) target = $region20
        $region19: #{tpu_custom_call.1} parent=11 // pred_region
          _
        $region20: #{tpu_custom_call.1} parent=11 // pred_fallthru
          _
      $region12: #{tpu_custom_call.1} parent=5 // pred_fallthru
        _
      %p146 = scmp.lt.s32.totalorder %s15, 4
      // Predicated region
      $region21: #{tpu_custom_call.1} parent=5 // pred_check
        %p147 = pneg %p146
      $region22: #{tpu_custom_call.1} parent=5 // pred_check_branch
        %149 = sbr.rel (%p147) target = $region24
      $region23: #{tpu_custom_call.1} parent=5 // pred_region
        // Predicated region
        $region25: #{tpu_custom_call.1} parent=23 // pred_check
          %p150 = pneg %p49
        $region26: #{tpu_custom_call.1} parent=23 // pred_check_branch
          %152 = sbr.rel (%p150) target = $region28
        $region27: #{tpu_custom_call.1} parent=23 // pred_region
          %s153 = sand.u32 %s39, 1
          %s154 = scalar_lea.sflag [#allocation3], %s153
          %s155 = sand.u32 %s39, 1
          %s156 = smul.addr %s155, 256
          %s157 = scalar_lea.vmem [#allocation2], %s156
          %s158 = smul.u32 2, %s23
          %160 = vsyncadd %s154, 0
          %s161 = smul.addr %s22, 64
          %s162 = sadd.s32 %s158, %s161
          %s163 = smul.addr %s162, 8
          %s164 = scalar_lea.hbm %s0, %s163
          %s165 = sshll.u32 %s164, 4
          %s166 = int_to_ptr.hbm [resolvable:$true] %s165
          %s167 = sshll.u32 %s157, 4
          %s168 = int_to_ptr.vmem [resolvable:$true] %s167
          %173 = dma.hbm_to_vmem [thread:$0]  %s166, 4096, %s168, %s154, 512, 256, 16
        $region28: #{tpu_custom_call.1} parent=23 // pred_fallthru
          _
      $region24: #{tpu_custom_call.1} parent=5 // pred_fallthru
        _
      %p174 = scmp.le.s32.totalorder 1, %s15
      %p175 = scmp.lt.s32.totalorder %s15, 5
      %p176 = pnand %p174, %p175
      %p177 = pneg %p176
      // Predicated region
      $region29: #{tpu_custom_call.1} parent=5 // pred_check
        _
      $region30: #{tpu_custom_call.1} parent=5 // pred_check_branch
        %179 = sbr.rel (%p176) target = $region32
      $region31: #{tpu_custom_call.1} parent=5 // pred_region
        %s180 = ssub.s32 %s15, 1
        %s181 = sand.u32 %s42, 1
        %s182 = scalar_lea.sflag [#allocation3], %s181
        %s183 = sand.u32 %s42, 1
        %s184 = smul.addr %s183, 256
        %s185 = scalar_lea.vmem [#allocation2], %s184
        // Predicated region
        $region33: #{tpu_custom_call.1} parent=31 // pred_check
          %p186 = pneg %p55
        $region34: #{tpu_custom_call.1} parent=31 // pred_check_branch
          %188 = sbr.rel (%p186) target = $region36
        $region35: #{tpu_custom_call.1} parent=31 // pred_region
          %190 = dma.done %s182, 4096
        $region36: #{tpu_custom_call.1} parent=31 // pred_fallthru
          _
        %s191 = sand.u32 %s42, 1
        %s192 = scalar_lea.sflag [#allocation3], %s191
        %s193 = sand.u32 %s42, 1
        %s194 = smul.addr %s193, 256
        %s195 = scalar_lea.vmem [#allocation2], %s194
        %p196 = pneg %p55
        %p197 = pneg %p52
        %p198 = pneg %p76
        %p199 = pneg %p73
        %p200 = pneg %p97
        %p201 = pneg %p94
        %p202 = pneg %p125
        %p203 = pneg %p122
        %s204 = sand.u32 %s112, 1
        %s205 = scalar_lea.sflag [#allocation4], %s204
        %s206 = sand.u32 %s112, 1
        %s207 = smul.addr %s206, 256
        %s208 = scalar_lea.vmem [#allocation5], %s207
        %s209 = smul.u32 2, %s25
        %s210 = smul.u32 2, %s25
        %v211 = vld [vmem:[%s185] sm:$0xff]
        %v212 = vld [vmem:[%s185 + $0x8] sm:$0xff]
        %v213 = vld [vmem:[%s185 + $0x10] sm:$0xff]
        %v214 = vld [vmem:[%s185 + $0x18] sm:$0xff]
        %v215 = vld [vmem:[%s185 + $0x20] sm:$0xff]
        %v216 = vld [vmem:[%s185 + $0x28] sm:$0xff]
        %v217 = vld [vmem:[%s185 + $0x30] sm:$0xff]
        %v218 = vld [vmem:[%s185 + $0x38] sm:$0xff]
        %v219 = vld [vmem:[%s185 + $0x40] sm:$0xff]
        %v220 = vld [vmem:[%s185 + $0x48] sm:$0xff]
        %v221 = vld [vmem:[%s185 + $0x50] sm:$0xff]
        %v222 = vld [vmem:[%s185 + $0x58] sm:$0xff]
        %v223 = vld [vmem:[%s185 + $0x60] sm:$0xff]
        %v224 = vld [vmem:[%s185 + $0x68] sm:$0xff]
        %v225 = vld [vmem:[%s185 + $0x70] sm:$0xff]
        %v226 = vld [vmem:[%s185 + $0x78] sm:$0xff]
        %v227 = vld [vmem:[%s185 + $0x80] sm:$0xff]
        %v228 = vld [vmem:[%s185 + $0x88] sm:$0xff]
        %v229 = vld [vmem:[%s185 + $0x90] sm:$0xff]
        %v230 = vld [vmem:[%s185 + $0x98] sm:$0xff]
        %v231 = vld [vmem:[%s185 + $0xa0] sm:$0xff]
        %v232 = vld [vmem:[%s185 + $0xa8] sm:$0xff]
        %v233 = vld [vmem:[%s185 + $0xb0] sm:$0xff]
        %v234 = vld [vmem:[%s185 + $0xb8] sm:$0xff]
        %v235 = vld [vmem:[%s185 + $0xc0] sm:$0xff]
        %v236 = vld [vmem:[%s185 + $0xc8] sm:$0xff]
        %v237 = vld [vmem:[%s185 + $0xd0] sm:$0xff]
        %v238 = vld [vmem:[%s185 + $0xd8] sm:$0xff]
        %v239 = vld [vmem:[%s185 + $0xe0] sm:$0xff]
        %v240 = vld [vmem:[%s185 + $0xe8] sm:$0xff]
        %v241 = vld [vmem:[%s185 + $0xf0] sm:$0xff]
        %v242 = vld [vmem:[%s185 + $0xf8] sm:$0xff]
        %v243 = vld [vmem:[%s1] sm:$0xff]
        %v244 = vld [vmem:[%s1 + $0x8] sm:$0xff]
        %v245 = vld [vmem:[%s1 + $0x10] sm:$0xff]
        %v246 = vld [vmem:[%s1 + $0x18] sm:$0xff]
        %v247 = vld [vmem:[%s1 + $0x20] sm:$0xff]
        %v248 = vld [vmem:[%s1 + $0x28] sm:$0xff]
        %v249 = vld [vmem:[%s1 + $0x30] sm:$0xff]
        %v250 = vld [vmem:[%s1 + $0x38] sm:$0xff]
        %v251 = vld [vmem:[%s1 + $0x40] sm:$0xff]
        %v252 = vld [vmem:[%s1 + $0x48] sm:$0xff]
        %v253 = vld [vmem:[%s1 + $0x50] sm:$0xff]
        %v254 = vld [vmem:[%s1 + $0x58] sm:$0xff]
        %v255 = vld [vmem:[%s1 + $0x60] sm:$0xff]
        %v256 = vld [vmem:[%s1 + $0x68] sm:$0xff]
        %v257 = vld [vmem:[%s1 + $0x70] sm:$0xff]
        %v258 = vld [vmem:[%s1 + $0x78] sm:$0xff]
        %v259 = vld [vmem:[%s2] sm:$0xff]
        %v260 = vld [vmem:[%s2 + $0x8] sm:$0xff]
        %v261 = vld [vmem:[%s2 + $0x10] sm:$0xff]
        %v262 = vld [vmem:[%s2 + $0x18] sm:$0xff]
        %v263 = vld [vmem:[%s2 + $0x20] sm:$0xff]
        %v264 = vld [vmem:[%s2 + $0x28] sm:$0xff]
        %v265 = vld [vmem:[%s2 + $0x30] sm:$0xff]
        %v266 = vld [vmem:[%s2 + $0x38] sm:$0xff]
        %v267 = vld [vmem:[%s2 + $0x40] sm:$0xff]
        %v268 = vld [vmem:[%s2 + $0x48] sm:$0xff]
        %v269 = vld [vmem:[%s2 + $0x50] sm:$0xff]
        %v270 = vld [vmem:[%s2 + $0x58] sm:$0xff]
        %v271 = vld [vmem:[%s2 + $0x60] sm:$0xff]
        %v272 = vld [vmem:[%s2 + $0x68] sm:$0xff]
        %v273 = vld [vmem:[%s2 + $0x70] sm:$0xff]
        %v274 = vld [vmem:[%s2 + $0x78] sm:$0xff]
        %276 = vset.pattern.permute.xlu0 0
        %277 = vperm.xlu0 %276, %v259
        %v278 = vpop.permute.xlu0 %277
        %281 = vset.pattern.permute.xlu0 0
        %282 = vperm.xlu0 %281, %v260
        %v283 = vpop.permute.xlu0 %282
        %286 = vset.pattern.permute.xlu0 0
        %287 = vperm.xlu0 %286, %v261
        %v288 = vpop.permute.xlu0 %287
        %291 = vset.pattern.permute.xlu0 0
        %292 = vperm.xlu0 %291, %v262
        %v293 = vpop.permute.xlu0 %292
        %296 = vset.pattern.permute.xlu0 0
        %297 = vperm.xlu0 %296, %v263
        %v298 = vpop.permute.xlu0 %297
        %301 = vset.pattern.permute.xlu0 0
        %302 = vperm.xlu0 %301, %v264
        %v303 = vpop.permute.xlu0 %302
        %306 = vset.pattern.permute.xlu0 0
        %307 = vperm.xlu0 %306, %v265
        %v308 = vpop.permute.xlu0 %307
        %311 = vset.pattern.permute.xlu0 0
        %312 = vperm.xlu0 %311, %v266
        %v313 = vpop.permute.xlu0 %312
        %316 = vset.pattern.permute.xlu0 0
        %317 = vperm.xlu0 %316, %v267
        %v318 = vpop.permute.xlu0 %317
        %321 = vset.pattern.permute.xlu0 0
        %322 = vperm.xlu0 %321, %v268
        %v323 = vpop.permute.xlu0 %322
        %326 = vset.pattern.permute.xlu0 0
        %327 = vperm.xlu0 %326, %v269
        %v328 = vpop.permute.xlu0 %327
        %331 = vset.pattern.permute.xlu0 0
        %332 = vperm.xlu0 %331, %v270
        %v333 = vpop.permute.xlu0 %332
        %336 = vset.pattern.permute.xlu0 0
        %337 = vperm.xlu0 %336, %v271
        %v338 = vpop.permute.xlu0 %337
        %341 = vset.pattern.permute.xlu0 0
        %342 = vperm.xlu0 %341, %v272
        %v343 = vpop.permute.xlu0 %342
        %346 = vset.pattern.permute.xlu0 0
        %347 = vperm.xlu0 %346, %v273
        %v348 = vpop.permute.xlu0 %347
        %351 = vset.pattern.permute.xlu0 0
        %352 = vperm.xlu0 %351, %v274
        %v353 = vpop.permute.xlu0 %352
        %355 = vmatpush.msra.mxu0 %v241
        %356 = vmatpush.msra.mxu0 %v239
        %357 = vmatpush.msra.mxu0 %v237
        %358 = vmatpush.msra.mxu0 %v235
        %359 = vmatpush.msra.mxu0 %v233
        %360 = vmatpush.msra.mxu0 %v231
        %361 = vmatpush.msra.mxu0 %v229
        %362 = vmatpush.msra.mxu0 %v227
        %363 = vmatpush.msra.mxu0 %v225
        %364 = vmatpush.msra.mxu0 %v223
        %365 = vmatpush.msra.mxu0 %v221
        %366 = vmatpush.msra.mxu0 %v219
        %367 = vmatpush.msra.mxu0 %v217
        %368 = vmatpush.msra.mxu0 %v215
        %369 = vmatpush.msra.mxu0 %v213
        %370 = vmatpush.msra.mxu0 %v211
        %371 = vmatmul.f32.gmra.mxu0 %v243
        %v372 = vpop.f32.mrf.mxu0
        %v373 = vadd.f32 %v278, %v372
        %374 = vmatmul.f32.gmra.mxu0 %v244
        %v375 = vpop.f32.mrf.mxu0
        %v376 = vadd.f32 %v283, %v375
        %377 = vmatmul.f32.gmra.mxu0 %v245
        %v378 = vpop.f32.mrf.mxu0
        %v379 = vadd.f32 %v288, %v378
        %380 = vmatmul.f32.gmra.mxu0 %v246
        %v381 = vpop.f32.mrf.mxu0
        %v382 = vadd.f32 %v293, %v381
        %383 = vmatmul.f32.gmra.mxu0 %v247
        %v384 = vpop.f32.mrf.mxu0
        %v385 = vadd.f32 %v298, %v384
        %386 = vmatmul.f32.gmra.mxu0 %v248
        %v387 = vpop.f32.mrf.mxu0
        %v388 = vadd.f32 %v303, %v387
        %389 = vmatmul.f32.gmra.mxu0 %v249
        %v390 = vpop.f32.mrf.mxu0
        %v391 = vadd.f32 %v308, %v390
        %392 = vmatmul.f32.gmra.mxu0 %v250
        %v393 = vpop.f32.mrf.mxu0
        %v394 = vadd.f32 %v313, %v393
        %395 = vmatmul.f32.gmra.mxu0 %v251
        %v396 = vpop.f32.mrf.mxu0
        %v397 = vadd.f32 %v318, %v396
        %398 = vmatmul.f32.gmra.mxu0 %v252
        %v399 = vpop.f32.mrf.mxu0
        %v400 = vadd.f32 %v323, %v399
        %401 = vmatmul.f32.gmra.mxu0 %v253
        %v402 = vpop.f32.mrf.mxu0
        %v403 = vadd.f32 %v328, %v402
        %404 = vmatmul.f32.gmra.mxu0 %v254
        %v405 = vpop.f32.mrf.mxu0
        %v406 = vadd.f32 %v333, %v405
        %407 = vmatmul.f32.gmra.mxu0 %v255
        %v408 = vpop.f32.mrf.mxu0
        %v409 = vadd.f32 %v338, %v408
        %410 = vmatmul.f32.gmra.mxu0 %v256
        %v411 = vpop.f32.mrf.mxu0
        %v412 = vadd.f32 %v343, %v411
        %413 = vmatmul.f32.gmra.mxu0 %v257
        %v414 = vpop.f32.mrf.mxu0
        %v415 = vadd.f32 %v348, %v414
        %416 = vmatmul.f32.gmra.mxu0 %v258
        %v417 = vpop.f32.mrf.mxu0
        %v418 = vadd.f32 %v353, %v417
        %419 = vdwg.mxu0
        %420 = vmatpush.msra.mxu0 %v242
        %421 = vmatpush.msra.mxu0 %v240
        %422 = vmatpush.msra.mxu0 %v238
        %423 = vmatpush.msra.mxu0 %v236
        %424 = vmatpush.msra.mxu0 %v234
        %425 = vmatpush.msra.mxu0 %v232
        %426 = vmatpush.msra.mxu0 %v230
        %427 = vmatpush.msra.mxu0 %v228
        %428 = vmatpush.msra.mxu0 %v226
        %429 = vmatpush.msra.mxu0 %v224
        %430 = vmatpush.msra.mxu0 %v222
        %431 = vmatpush.msra.mxu0 %v220
        %432 = vmatpush.msra.mxu0 %v218
        %433 = vmatpush.msra.mxu0 %v216
        %434 = vmatpush.msra.mxu0 %v214
        %435 = vmatpush.msra.mxu0 %v212
        %436 = vmatmul.f32.gmra.mxu0 %v243
        %v437 = vpop.f32.mrf.mxu0
        %v438 = vadd.f32 %v278, %v437
        %439 = vmatmul.f32.gmra.mxu0 %v244
        %v440 = vpop.f32.mrf.mxu0
        %v441 = vadd.f32 %v283, %v440
        %442 = vmatmul.f32.gmra.mxu0 %v245
        %v443 = vpop.f32.mrf.mxu0
        %v444 = vadd.f32 %v288, %v443
        %445 = vmatmul.f32.gmra.mxu0 %v246
        %v446 = vpop.f32.mrf.mxu0
        %v447 = vadd.f32 %v293, %v446
        %448 = vmatmul.f32.gmra.mxu0 %v247
        %v449 = vpop.f32.mrf.mxu0
        %v450 = vadd.f32 %v298, %v449
        %451 = vmatmul.f32.gmra.mxu0 %v248
        %v452 = vpop.f32.mrf.mxu0
        %v453 = vadd.f32 %v303, %v452
        %454 = vmatmul.f32.gmra.mxu0 %v249
        %v455 = vpop.f32.mrf.mxu0
        %v456 = vadd.f32 %v308, %v455
        %457 = vmatmul.f32.gmra.mxu0 %v250
        %v458 = vpop.f32.mrf.mxu0
        %v459 = vadd.f32 %v313, %v458
        %460 = vmatmul.f32.gmra.mxu0 %v251
        %v461 = vpop.f32.mrf.mxu0
        %v462 = vadd.f32 %v318, %v461
        %463 = vmatmul.f32.gmra.mxu0 %v252
        %v464 = vpop.f32.mrf.mxu0
        %v465 = vadd.f32 %v323, %v464
        %466 = vmatmul.f32.gmra.mxu0 %v253
        %v467 = vpop.f32.mrf.mxu0
        %v468 = vadd.f32 %v328, %v467
        %469 = vmatmul.f32.gmra.mxu0 %v254
        %v470 = vpop.f32.mrf.mxu0
        %v471 = vadd.f32 %v333, %v470
        %472 = vmatmul.f32.gmra.mxu0 %v255
        %v473 = vpop.f32.mrf.mxu0
        %v474 = vadd.f32 %v338, %v473
        %475 = vmatmul.f32.gmra.mxu0 %v256
        %v476 = vpop.f32.mrf.mxu0
        %v477 = vadd.f32 %v343, %v476
        %478 = vmatmul.f32.gmra.mxu0 %v257
        %v479 = vpop.f32.mrf.mxu0
        %v480 = vadd.f32 %v348, %v479
        %481 = vmatmul.f32.gmra.mxu0 %v258
        %v482 = vpop.f32.mrf.mxu0
        %v483 = vadd.f32 %v353, %v482
        %484 = vdwg.mxu0
        %485 = vst [vmem:[%s208] sm:$0xff] %v373
        %486 = vst [vmem:[%s208 + $0x8] sm:$0xff] %v438
        %487 = vst [vmem:[%s208 + $0x10] sm:$0xff] %v376
        %488 = vst [vmem:[%s208 + $0x18] sm:$0xff] %v441
        %489 = vst [vmem:[%s208 + $0x20] sm:$0xff] %v379
        %490 = vst [vmem:[%s208 + $0x28] sm:$0xff] %v444
        %491 = vst [vmem:[%s208 + $0x30] sm:$0xff] %v382
        %492 = vst [vmem:[%s208 + $0x38] sm:$0xff] %v447
        %493 = vst [vmem:[%s208 + $0x40] sm:$0xff] %v385
        %494 = vst [vmem:[%s208 + $0x48] sm:$0xff] %v450
        %495 = vst [vmem:[%s208 + $0x50] sm:$0xff] %v388
        %496 = vst [vmem:[%s208 + $0x58] sm:$0xff] %v453
        %497 = vst [vmem:[%s208 + $0x60] sm:$0xff] %v391
        %498 = vst [vmem:[%s208 + $0x68] sm:$0xff] %v456
        %499 = vst [vmem:[%s208 + $0x70] sm:$0xff] %v394
        %500 = vst [vmem:[%s208 + $0x78] sm:$0xff] %v459
        %501 = vst [vmem:[%s208 + $0x80] sm:$0xff] %v397
        %502 = vst [vmem:[%s208 + $0x88] sm:$0xff] %v462
        %503 = vst [vmem:[%s208 + $0x90] sm:$0xff] %v400
        %504 = vst [vmem:[%s208 + $0x98] sm:$0xff] %v465
        %505 = vst [vmem:[%s208 + $0xa0] sm:$0xff] %v403
        %506 = vst [vmem:[%s208 + $0xa8] sm:$0xff] %v468
        %507 = vst [vmem:[%s208 + $0xb0] sm:$0xff] %v406
        %508 = vst [vmem:[%s208 + $0xb8] sm:$0xff] %v471
        %509 = vst [vmem:[%s208 + $0xc0] sm:$0xff] %v409
        %510 = vst [vmem:[%s208 + $0xc8] sm:$0xff] %v474
        %511 = vst [vmem:[%s208 + $0xd0] sm:$0xff] %v412
        %512 = vst [vmem:[%s208 + $0xd8] sm:$0xff] %v477
        %513 = vst [vmem:[%s208 + $0xe0] sm:$0xff] %v415
        %514 = vst [vmem:[%s208 + $0xe8] sm:$0xff] %v480
        %515 = vst [vmem:[%s208 + $0xf0] sm:$0xff] %v418
        %516 = vst [vmem:[%s208 + $0xf8] sm:$0xff] %v483
        %s517 = sand.u32 %s112, 1
        %s518 = scalar_lea.sflag [#allocation4], %s517
        %s519 = sand.u32 %s112, 1
        %s520 = smul.addr %s519, 256
        %s521 = scalar_lea.vmem [#allocation5], %s520
        // Predicated region
        $region37: #{tpu_custom_call.1} parent=31 // pred_check
          %p522 = pneg %p122
        $region38: #{tpu_custom_call.1} parent=31 // pred_check_branch
          %524 = sbr.rel (%p522) target = $region40
        $region39: #{tpu_custom_call.1} parent=31 // pred_region
          %s525 = smul.u32 2, %s25
          %527 = vsyncadd %s518, 0
          %s528 = smul.addr %s24, 64
          %s529 = sadd.s32 %s525, %s528
          %s530 = smul.addr %s529, 8
          %s531 = scalar_lea.hbm %s3, %s530
          %s532 = sshll.u32 %s521, 4
          %s533 = int_to_ptr.vmem [resolvable:$true] %s532
          %s534 = sshll.u32 %s531, 4
          %s535 = int_to_ptr.hbm [resolvable:$true] %s534
          %540 = dma.vmem_to_hbm [thread:$0]  %s533, 4096, %s535, %s518, 256, 512, 16
        $region40: #{tpu_custom_call.1} parent=31 // pred_fallthru
          _
      $region32: #{tpu_custom_call.1} parent=5 // pred_fallthru
        _
      %p541 = scmp.le.s32.totalorder 2, %s15
      // Predicated region
      $region41: #{tpu_custom_call.1} parent=5 // pred_check
        %p542 = pneg %p541
      $region42: #{tpu_custom_call.1} parent=5 // pred_check_branch
        %544 = sbr.rel (%p542) target = $region44
      $region43: #{tpu_custom_call.1} parent=5 // pred_region
        %s545 = ssub.s32 %s15, 2
        // Predicated region
        $region45: #{tpu_custom_call.1} parent=43 // pred_check
          %p546 = pneg %p128
        $region46: #{tpu_custom_call.1} parent=43 // pred_check_branch
          %548 = sbr.rel (%p546) target = $region48
        $region47: #{tpu_custom_call.1} parent=43 // pred_region
          %s549 = sand.u32 %s113, 1
          %s550 = scalar_lea.sflag [#allocation4], %s549
          %s551 = sand.u32 %s113, 1
          %s552 = smul.addr %s551, 256
          %s553 = scalar_lea.vmem [#allocation5], %s552
          %555 = dma.done %s550, 4096
        $region48: #{tpu_custom_call.1} parent=43 // pred_fallthru
          _
      $region44: #{tpu_custom_call.1} parent=5 // pred_fallthru
        _
    $region6: #{tpu_custom_call.1} parent=1 // loop_footer
      %s19 = sadd.s32 1, %s15
    $region7: #{tpu_custom_call.1} parent=1 // loop_footer_branch
      %14 = sbr.rel target = $region3
    $region8: #{tpu_custom_call.1} parent=1 // loop_exit
      _
    %556 = vsyncpa [#allocation3], 1
    %s557 = scalar_lea.sflag [#allocation3], 1
    %558 = vsyncpa %s557, 1
    %559 = vsyncpa [#allocation4], 1
    %s560 = scalar_lea.sflag [#allocation4], 1
    %561 = vsyncpa %s560, 1

// kernel: tpu_custom_call.1
$region0: #{tpu_custom_call.1}
  #allocation0 [shape = 'u32[]', space=smem, size = 0x4, offset = 0x4, fixed_abs, tag = 'smem constant byte address 0x4 - core index']
  #allocation1 [shape = 'u32[72,128]{1,0:T(1,128)}', space=vmem, size = 0x9000, scoped, tag = 'internal scratch']
  %s0 = inlined_call_operand.hbm [shape: f32[2,128,512], index: 0, kind: input, shape index: {}]
  %s1 = inlined_call_operand.vmem [shape: f32[128,128], index: 1, kind: input, shape index: {}]
  %s2 = inlined_call_operand.vmem [shape: f32[128,1], index: 2, kind: input, shape index: {}]
  %s3 = inlined_call_operand.hbm [shape: f32[2,128,512], index: 3, kind: output, shape index: {}]
  %s4 = sld [smem:[#allocation0]]
  $region49: #{tpu_custom_call.1} parent=0
    _
  %s6 = ssub.s32 1, %s4
  %s7 = scalar_select 0, %s6, %s4
  $region1: #{tpu_custom_call.1} parent=0
    #allocation2 [shape = 'u8[262144]{0}', space=vmem, size = 0x40000, scoped, tag = 'input window, operand 0']
    #allocation3 [shape = 's32[2]{0}', space=sflag, size = 0x8, scoped, tag = 'scoped memory for tpu_custom_call.1']
    #allocation4 [shape = 's32[2]{0}', space=sflag, size = 0x8, scoped, tag = 'scoped memory for tpu_custom_call.1']
    #allocation5 [shape = 'u8[262144]{0}', space=vmem, size = 0x40000, scoped, tag = 'output window, operand 0']
    %8 = vsyncpa [#allocation3], 0
    %s9 = scalar_lea.sflag [#allocation3], 1
    %10 = vsyncpa %s9, 0
    %11 = vsyncpa [#allocation4], 0
    %s12 = scalar_lea.sflag [#allocation4], 1
    %13 = vsyncpa %s12, 0
    loop: start=0, step=1, limit=6
    $region2: #{tpu_custom_call.1} parent=1 // loop_pre_header
      _
    $region3: #{tpu_custom_call.1} parent=1 // loop_header
      %s15 = sphi 0, %s19
      %p16 = scmp.ge.s32.totalorder %s15, 6
      %s22 = sphi 0, %s34
      %s23 = sphi 0, %s30
      %s24 = sphi 0, %s22
      %s25 = sphi 0, %s23
      %s26 = sphi 0, %s24
      %s27 = sphi 0, %s25
      %s39 = sphi 0, %s41
      %s42 = sphi 0, %s39
      %s43 = sphi 0, %s42
      %s59 = sphi 0, %s43
      %s63 = sphi 0, %s63
      %s65 = sphi 0, %s63
      %s66 = sphi 0, %s65
      %s80 = sphi 0, %s66
      %s84 = sphi 0, %s84
      %s86 = sphi 0, %s84
      %s87 = sphi 0, %s86
      %s101 = sphi 0, %s87
      %s109 = sphi 0, %s111
      %s112 = sphi 0, %s109
      %s113 = sphi 0, %s112
      %s129 = sphi 0, %s113
    $region4: #{tpu_custom_call.1} parent=1 // loop_header_branch
      %18 = sbr.rel (%p16) target = $region8
    $region5: #{tpu_custom_call.1} parent=1 // loop_body
      %s20 = ssub.s32 %s15, 1
      %s21 = ssub.s32 %s15, 2
      %s28 = sadd.s32 1, %s23
      %p29 = scmp.ge.s32.totalorder %s28, 2
      %s30 = scalar_select %p29, 0, %s28
      %s31 = sadd.s32 1, %s22
      %s32 = scalar_select %p29, %s31, %s22
      %p33 = scmp.ge.s32.totalorder %s32, 2
      %s34 = scalar_select %p33, 0, %s32
      %s35 = ssub.s32 %s22, %s34
      %s36 = ssub.s32 %s23, %s30
      %s37 = sor.u32 %s35, %s36
      %p38 = scmp.eq.s32.totalorder %s37, 0
      %s40 = sadd.s32 %s39, 1
      %s41 = scalar_select %p38, %s39, %s40
      %p44 = pneg %p38
      %p45 = scmp.eq.s32.totalorder %s15, 3
      %p46 = por %p44, %p45
      %p47 = scmp.ne.s32.totalorder %s39, %s42
      %p48 = scmp.eq.s32.totalorder %s15, 0
      %p49 = por %p47, %p48
      %p50 = scmp.ne.s32.totalorder %s39, %s42
      %p51 = scmp.eq.s32.totalorder %s20, 3
      %p52 = por %p50, %p51
      %p53 = scmp.ne.s32.totalorder %s42, %s43
      %p54 = scmp.eq.s32.totalorder %s20, 0
      %p55 = por %p53, %p54
      %p56 = scmp.ne.s32.totalorder %s42, %s43
      %p57 = scmp.eq.s32.totalorder %s21, 3
      %p58 = por %p56, %p57
      %p60 = scmp.ne.s32.totalorder %s43, %s59
      %p61 = scmp.eq.s32.totalorder %s21, 0
      %p62 = por %p60, %p61
      %s64 = sadd.s32 %s63, 1
      %p67 = scmp.eq.s32.totalorder %s15, 3
      %p68 = scmp.ne.s32.totalorder %s63, %s65
      %p69 = scmp.eq.s32.totalorder %s15, 0
      %p70 = por %p68, %p69
      %p71 = scmp.ne.s32.totalorder %s63, %s65
      %p72 = scmp.eq.s32.totalorder %s20, 3
      %p73 = por %p71, %p72
      %p74 = scmp.ne.s32.totalorder %s65, %s66
      %p75 = scmp.eq.s32.totalorder %s20, 0
      %p76 = por %p74, %p75
      %p77 = scmp.ne.s32.totalorder %s65, %s66
      %p78 = scmp.eq.s32.totalorder %s21, 3
      %p79 = por %p77, %p78
      %p81 = scmp.ne.s32.totalorder %s66, %s80
      %p82 = scmp.eq.s32.totalorder %s21, 0
      %p83 = por %p81, %p82
      %s85 = sadd.s32 %s84, 1
      %p88 = scmp.eq.s32.totalorder %s15, 3
      %p89 = scmp.ne.s32.totalorder %s84, %s86
      %p90 = scmp.eq.s32.totalorder %s15, 0
      %p91 = por %p89, %p90
      %p92 = scmp.ne.s32.totalorder %s84, %s86
      %p93 = scmp.eq.s32.totalorder %s20, 3
      %p94 = por %p92, %p93
      %p95 = scmp.ne.s32.totalorder %s86, %s87
      %p96 = scmp.eq.s32.totalorder %s20, 0
      %p97 = por %p95, %p96
      %p98 = scmp.ne.s32.totalorder %s86, %s87
      %p99 = scmp.eq.s32.totalorder %s21, 3
      %p100 = por %p98, %p99
      %p102 = scmp.ne.s32.totalorder %s87, %s101
      %p103 = scmp.eq.s32.totalorder %s21, 0
      %p104 = por %p102, %p103
      %s105 = ssub.s32 %s22, %s34
      %s106 = ssub.s32 %s23, %s30
      %s107 = sor.u32 %s105, %s106
      %p108 = scmp.eq.s32.totalorder %s107, 0
      %s110 = sadd.s32 %s109, 1
      %s111 = scalar_select %p108, %s109, %s110
      %p114 = pneg %p108
      %p115 = scmp.eq.s32.totalorder %s15, 3
      %p116 = por %p114, %p115
      %p117 = scmp.ne.s32.totalorder %s109, %s112
      %p118 = scmp.eq.s32.totalorder %s15, 0
      %p119 = por %p117, %p118
      %p120 = scmp.ne.s32.totalorder %s109, %s112
      %p121 = scmp.eq.s32.totalorder %s20, 3
      %p122 = por %p120, %p121
      %p123 = scmp.ne.s32.totalorder %s112, %s113
      %p124 = scmp.eq.s32.totalorder %s20, 0
      %p125 = por %p123, %p124
      %p126 = scmp.ne.s32.totalorder %s112, %s113
      %p127 = scmp.eq.s32.totalorder %s21, 3
      %p128 = por %p126, %p127
      %p130 = scmp.ne.s32.totalorder %s113, %s129
      %p131 = scmp.eq.s32.totalorder %s21, 0
      %p132 = por %p130, %p131
      %p133 = scmp.le.s32.totalorder 1, %s15
      %p134 = scmp.lt.s32.totalorder %s15, 5
      %p135 = pnand %p133, %p134
      %p136 = pneg %p135
      // Predicated region
      $region9: #{tpu_custom_call.1} parent=5 // pred_check
        _
      $region10: #{tpu_custom_call.1} parent=5 // pred_check_branch
        %138 = sbr.rel (%p135) target = $region12
      $region11: #{tpu_custom_call.1} parent=5 // pred_region
        %s139 = ssub.s32 %s15, 1
        // Predicated region
        $region13: #{tpu_custom_call.1} parent=11 // pred_check
          %p140 = pneg %p76
        $region14: #{tpu_custom_call.1} parent=11 // pred_check_branch
          %142 = sbr.rel (%p140) target = $region16
        $region15: #{tpu_custom_call.1} parent=11 // pred_region
          _
        $region16: #{tpu_custom_call.1} parent=11 // pred_fallthru
          _
        // Predicated region
        $region17: #{tpu_custom_call.1} parent=11 // pred_check
          %p143 = pneg %p97
        $region18: #{tpu_custom_call.1} parent=11 // pred_check_branch
          %145 = sbr.rel (%p143) target = $region20
        $region19: #{tpu_custom_call.1} parent=11 // pred_region
          _
        $region20: #{tpu_custom_call.1} parent=11 // pred_fallthru
          _
      $region12: #{tpu_custom_call.1} parent=5 // pred_fallthru
        _
      %p146 = scmp.lt.s32.totalorder %s15, 4
      // Predicated region
      $region21: #{tpu_custom_call.1} parent=5 // pred_check
        %p147 = pneg %p146
      $region22: #{tpu_custom_call.1} parent=5 // pred_check_branch
        %149 = sbr.rel (%p147) target = $region24
      $region23: #{tpu_custom_call.1} parent=5 // pred_region
        // Predicated region
        $region25: #{tpu_custom_call.1} parent=23 // pred_check
          %p150 = pneg %p49
        $region26: #{tpu_custom_call.1} parent=23 // pred_check_branch
          %152 = sbr.rel (%p150) target = $region28
        $region27: #{tpu_custom_call.1} parent=23 // pred_region
          %s153 = sand.u32 %s39, 1
          %s154 = scalar_lea.sflag [#allocation3], %s153
          %s155 = sand.u32 %s39, 1
          %s156 = smul.addr %s155, 256
          %s157 = scalar_lea.vmem [#allocation2], %s156
          %s158 = smul.u32 2, %s23
          %160 = vsyncadd %s154, 0
          %s161 = smul.addr %s22, 64
          %s162 = sadd.s32 %s158, %s161
          %s163 = smul.addr %s162, 8
          %s164 = scalar_lea.hbm %s0, %s163
          %s165 = sshll.u32 %s164, 4
          %s166 = int_to_ptr.hbm [resolvable:$true] %s165
          %s167 = sshll.u32 %s157, 4
          %s168 = int_to_ptr.vmem [resolvable:$true] %s167
          %173 = dma.hbm_to_vmem [thread:$0]  %s166, 4096, %s168, %s154, 512, 256, 16
        $region28: #{tpu_custom_call.1} parent=23 // pred_fallthru
          _
      $region24: #{tpu_custom_call.1} parent=5 // pred_fallthru
        _
      %p174 = scmp.le.s32.totalorder 1, %s15
      %p175 = scmp.lt.s32.totalorder %s15, 5
      %p176 = pnand %p174, %p175
      %p177 = pneg %p176
      // Predicated region
      $region29: #{tpu_custom_call.1} parent=5 // pred_check
        _
      $region30: #{tpu_custom_call.1} parent=5 // pred_check_branch
        %179 = sbr.rel (%p176) target = $region32
      $region31: #{tpu_custom_call.1} parent=5 // pred_region
        %s180 = ssub.s32 %s15, 1
        %s181 = sand.u32 %s42, 1
        %s182 = scalar_lea.sflag [#allocation3], %s181
        %s183 = sand.u32 %s42, 1
        %s184 = smul.addr %s183, 256
        %s185 = scalar_lea.vmem [#allocation2], %s184
        // Predicated region
        $region33: #{tpu_custom_call.1} parent=31 // pred_check
          %p186 = pneg %p55
        $region34: #{tpu_custom_call.1} parent=31 // pred_check_branch
          %188 = sbr.rel (%p186) target = $region36
        $region35: #{tpu_custom_call.1} parent=31 // pred_region
          %190 = dma.done %s182, 4096
        $region36: #{tpu_custom_call.1} parent=31 // pred_fallthru
          _
        %s191 = sand.u32 %s42, 1
        %s192 = scalar_lea.sflag [#allocation3], %s191
        %s193 = sand.u32 %s42, 1
        %s194 = smul.addr %s193, 256
        %s195 = scalar_lea.vmem [#allocation2], %s194
        %p196 = pneg %p55
        %p197 = pneg %p52
        %p198 = pneg %p76
        %p199 = pneg %p73
        %p200 = pneg %p97
        %p201 = pneg %p94
        %p202 = pneg %p125
        %p203 = pneg %p122
        %s204 = sand.u32 %s112, 1
        %s205 = scalar_lea.sflag [#allocation4], %s204
        %s206 = sand.u32 %s112, 1
        %s207 = smul.addr %s206, 256
        %s208 = scalar_lea.vmem [#allocation5], %s207
        %s209 = smul.u32 2, %s25
        %s210 = smul.u32 2, %s25
        %v211 = vld [vmem:[%s185] sm:$0xff]
        %v212 = vld [vmem:[%s185 + $0x8] sm:$0xff]
        %v213 = vld [vmem:[%s185 + $0x10] sm:$0xff]
        %v214 = vld [vmem:[%s185 + $0x18] sm:$0xff]
        %v215 = vld [vmem:[%s185 + $0x20] sm:$0xff]
        %v216 = vld [vmem:[%s185 + $0x28] sm:$0xff]
        %v217 = vld [vmem:[%s185 + $0x30] sm:$0xff]
        %v218 = vld [vmem:[%s185 + $0x38] sm:$0xff]
        %v219 = vld [vmem:[%s185 + $0x40] sm:$0xff]
        %v220 = vld [vmem:[%s185 + $0x48] sm:$0xff]
        %v221 = vld [vmem:[%s185 + $0x50] sm:$0xff]
        %v222 = vld [vmem:[%s185 + $0x58] sm:$0xff]
        %v223 = vld [vmem:[%s185 + $0x60] sm:$0xff]
        %v224 = vld [vmem:[%s185 + $0x68] sm:$0xff]
        %v225 = vld [vmem:[%s185 + $0x70] sm:$0xff]
        %v226 = vld [vmem:[%s185 + $0x78] sm:$0xff]
        %v227 = vld [vmem:[%s185 + $0x80] sm:$0xff]
        %v228 = vld [vmem:[%s185 + $0x88] sm:$0xff]
        %v229 = vld [vmem:[%s185 + $0x90] sm:$0xff]
        %v230 = vld [vmem:[%s185 + $0x98] sm:$0xff]
        %v231 = vld [vmem:[%s185 + $0xa0] sm:$0xff]
        %v232 = vld [vmem:[%s185 + $0xa8] sm:$0xff]
        %v233 = vld [vmem:[%s185 + $0xb0] sm:$0xff]
        %v234 = vld [vmem:[%s185 + $0xb8] sm:$0xff]
        %v235 = vld [vmem:[%s185 + $0xc0] sm:$0xff]
        %v236 = vld [vmem:[%s185 + $0xc8] sm:$0xff]
        %v237 = vld [vmem:[%s185 + $0xd0] sm:$0xff]
        %v238 = vld [vmem:[%s185 + $0xd8] sm:$0xff]
        %v239 = vld [vmem:[%s185 + $0xe0] sm:$0xff]
        %v240 = vld [vmem:[%s185 + $0xe8] sm:$0xff]
        %v241 = vld [vmem:[%s185 + $0xf0] sm:$0xff]
        %v242 = vld [vmem:[%s185 + $0xf8] sm:$0xff]
        %v243 = vld [vmem:[%s1] sm:$0xff]
        %v244 = vld [vmem:[%s1 + $0x8] sm:$0xff]
        %v245 = vld [vmem:[%s1 + $0x10] sm:$0xff]
        %v246 = vld [vmem:[%s1 + $0x18] sm:$0xff]
        %v247 = vld [vmem:[%s1 + $0x20] sm:$0xff]
        %v248 = vld [vmem:[%s1 + $0x28] sm:$0xff]
        %v249 = vld [vmem:[%s1 + $0x30] sm:$0xff]
        %v250 = vld [vmem:[%s1 + $0x38] sm:$0xff]
        %v251 = vld [vmem:[%s1 + $0x40] sm:$0xff]
        %v252 = vld [vmem:[%s1 + $0x48] sm:$0xff]
        %v253 = vld [vmem:[%s1 + $0x50] sm:$0xff]
        %v254 = vld [vmem:[%s1 + $0x58] sm:$0xff]
        %v255 = vld [vmem:[%s1 + $0x60] sm:$0xff]
        %v256 = vld [vmem:[%s1 + $0x68] sm:$0xff]
        %v257 = vld [vmem:[%s1 + $0x70] sm:$0xff]
        %v258 = vld [vmem:[%s1 + $0x78] sm:$0xff]
        %v259 = vld [vmem:[%s2] sm:$0xff]
        %v260 = vld [vmem:[%s2 + $0x8] sm:$0xff]
        %v261 = vld [vmem:[%s2 + $0x10] sm:$0xff]
        %v262 = vld [vmem:[%s2 + $0x18] sm:$0xff]
        %v263 = vld [vmem:[%s2 + $0x20] sm:$0xff]
        %v264 = vld [vmem:[%s2 + $0x28] sm:$0xff]
        %v265 = vld [vmem:[%s2 + $0x30] sm:$0xff]
        %v266 = vld [vmem:[%s2 + $0x38] sm:$0xff]
        %v267 = vld [vmem:[%s2 + $0x40] sm:$0xff]
        %v268 = vld [vmem:[%s2 + $0x48] sm:$0xff]
        %v269 = vld [vmem:[%s2 + $0x50] sm:$0xff]
        %v270 = vld [vmem:[%s2 + $0x58] sm:$0xff]
        %v271 = vld [vmem:[%s2 + $0x60] sm:$0xff]
        %v272 = vld [vmem:[%s2 + $0x68] sm:$0xff]
        %v273 = vld [vmem:[%s2 + $0x70] sm:$0xff]
        %v274 = vld [vmem:[%s2 + $0x78] sm:$0xff]
        %276 = vset.pattern.permute.xlu0 0
        %277 = vperm.xlu0 %276, %v259
        %v278 = vpop.permute.xlu0 %277
        %281 = vset.pattern.permute.xlu0 0
        %282 = vperm.xlu0 %281, %v260
        %v283 = vpop.permute.xlu0 %282
        %286 = vset.pattern.permute.xlu0 0
        %287 = vperm.xlu0 %286, %v261
        %v288 = vpop.permute.xlu0 %287
        %291 = vset.pattern.permute.xlu0 0
        %292 = vperm.xlu0 %291, %v262
        %v293 = vpop.permute.xlu0 %292
        %296 = vset.pattern.permute.xlu0 0
        %297 = vperm.xlu0 %296, %v263
        %v298 = vpop.permute.xlu0 %297
        %301 = vset.pattern.permute.xlu0 0
        %302 = vperm.xlu0 %301, %v264
        %v303 = vpop.permute.xlu0 %302
        %306 = vset.pattern.permute.xlu0 0
        %307 = vperm.xlu0 %306, %v265
        %v308 = vpop.permute.xlu0 %307
        %311 = vset.pattern.permute.xlu0 0
        %312 = vperm.xlu0 %311, %v266
        %v313 = vpop.permute.xlu0 %312
        %316 = vset.pattern.permute.xlu0 0
        %317 = vperm.xlu0 %316, %v267
        %v318 = vpop.permute.xlu0 %317
        %321 = vset.pattern.permute.xlu0 0
        %322 = vperm.xlu0 %321, %v268
        %v323 = vpop.permute.xlu0 %322
        %326 = vset.pattern.permute.xlu0 0
        %327 = vperm.xlu0 %326, %v269
        %v328 = vpop.permute.xlu0 %327
        %331 = vset.pattern.permute.xlu0 0
        %332 = vperm.xlu0 %331, %v270
        %v333 = vpop.permute.xlu0 %332
        %336 = vset.pattern.permute.xlu0 0
        %337 = vperm.xlu0 %336, %v271
        %v338 = vpop.permute.xlu0 %337
        %341 = vset.pattern.permute.xlu0 0
        %342 = vperm.xlu0 %341, %v272
        %v343 = vpop.permute.xlu0 %342
        %346 = vset.pattern.permute.xlu0 0
        %347 = vperm.xlu0 %346, %v273
        %v348 = vpop.permute.xlu0 %347
        %351 = vset.pattern.permute.xlu0 0
        %352 = vperm.xlu0 %351, %v274
        %v353 = vpop.permute.xlu0 %352
        %355 = vmatpush.msra.mxu0 %v241
        %356 = vmatpush.msra.mxu0 %v239
        %357 = vmatpush.msra.mxu0 %v237
        %358 = vmatpush.msra.mxu0 %v235
        %359 = vmatpush.msra.mxu0 %v233
        %360 = vmatpush.msra.mxu0 %v231
        %361 = vmatpush.msra.mxu0 %v229
        %362 = vmatpush.msra.mxu0 %v227
        %363 = vmatpush.msra.mxu0 %v225
        %364 = vmatpush.msra.mxu0 %v223
        %365 = vmatpush.msra.mxu0 %v221
        %366 = vmatpush.msra.mxu0 %v219
        %367 = vmatpush.msra.mxu0 %v217
        %368 = vmatpush.msra.mxu0 %v215
        %369 = vmatpush.msra.mxu0 %v213
        %370 = vmatpush.msra.mxu0 %v211
        %371 = vmatmul.f32.gmra.mxu0 %v243
        %v372 = vpop.f32.mrf.mxu0
        %v373 = vadd.f32 %v278, %v372
        %374 = vmatmul.f32.gmra.mxu0 %v244
        %v375 = vpop.f32.mrf.mxu0
        %v376 = vadd.f32 %v283, %v375
        %377 = vmatmul.f32.gmra.mxu0 %v245
        %v378 = vpop.f32.mrf.mxu0
        %v379 = vadd.f32 %v288, %v378
        %380 = vmatmul.f32.gmra.mxu0 %v246
        %v381 = vpop.f32.mrf.mxu0
        %v382 = vadd.f32 %v293, %v381
        %383 = vmatmul.f32.gmra.mxu0 %v247
        %v384 = vpop.f32.mrf.mxu0
        %v385 = vadd.f32 %v298, %v384
        %386 = vmatmul.f32.gmra.mxu0 %v248
        %v387 = vpop.f32.mrf.mxu0
        %v388 = vadd.f32 %v303, %v387
        %389 = vmatmul.f32.gmra.mxu0 %v249
        %v390 = vpop.f32.mrf.mxu0
        %v391 = vadd.f32 %v308, %v390
        %392 = vmatmul.f32.gmra.mxu0 %v250
        %v393 = vpop.f32.mrf.mxu0
        %v394 = vadd.f32 %v313, %v393
        %395 = vmatmul.f32.gmra.mxu0 %v251
        %v396 = vpop.f32.mrf.mxu0
        %v397 = vadd.f32 %v318, %v396
        %398 = vmatmul.f32.gmra.mxu0 %v252
        %v399 = vpop.f32.mrf.mxu0
        %v400 = vadd.f32 %v323, %v399
        %401 = vmatmul.f32.gmra.mxu0 %v253
        %v402 = vpop.f32.mrf.mxu0
        %v403 = vadd.f32 %v328, %v402
        %404 = vmatmul.f32.gmra.mxu0 %v254
        %v405 = vpop.f32.mrf.mxu0
        %v406 = vadd.f32 %v333, %v405
        %407 = vmatmul.f32.gmra.mxu0 %v255
        %v408 = vpop.f32.mrf.mxu0
        %v409 = vadd.f32 %v338, %v408
        %410 = vmatmul.f32.gmra.mxu0 %v256
        %v411 = vpop.f32.mrf.mxu0
        %v412 = vadd.f32 %v343, %v411
        %413 = vmatmul.f32.gmra.mxu0 %v257
        %v414 = vpop.f32.mrf.mxu0
        %v415 = vadd.f32 %v348, %v414
        %416 = vmatmul.f32.gmra.mxu0 %v258
        %v417 = vpop.f32.mrf.mxu0
        %v418 = vadd.f32 %v353, %v417
        %419 = vdwg.mxu0
        %420 = vmatpush.msra.mxu0 %v242
        %421 = vmatpush.msra.mxu0 %v240
        %422 = vmatpush.msra.mxu0 %v238
        %423 = vmatpush.msra.mxu0 %v236
        %424 = vmatpush.msra.mxu0 %v234
        %425 = vmatpush.msra.mxu0 %v232
        %426 = vmatpush.msra.mxu0 %v230
        %427 = vmatpush.msra.mxu0 %v228
        %428 = vmatpush.msra.mxu0 %v226
        %429 = vmatpush.msra.mxu0 %v224
        %430 = vmatpush.msra.mxu0 %v222
        %431 = vmatpush.msra.mxu0 %v220
        %432 = vmatpush.msra.mxu0 %v218
        %433 = vmatpush.msra.mxu0 %v216
        %434 = vmatpush.msra.mxu0 %v214
        %435 = vmatpush.msra.mxu0 %v212
        %436 = vmatmul.f32.gmra.mxu0 %v243
        %v437 = vpop.f32.mrf.mxu0
        %v438 = vadd.f32 %v278, %v437
        %439 = vmatmul.f32.gmra.mxu0 %v244
        %v440 = vpop.f32.mrf.mxu0
        %v441 = vadd.f32 %v283, %v440
        %442 = vmatmul.f32.gmra.mxu0 %v245
        %v443 = vpop.f32.mrf.mxu0
        %v444 = vadd.f32 %v288, %v443
        %445 = vmatmul.f32.gmra.mxu0 %v246
        %v446 = vpop.f32.mrf.mxu0
        %v447 = vadd.f32 %v293, %v446
        %448 = vmatmul.f32.gmra.mxu0 %v247
        %v449 = vpop.f32.mrf.mxu0
        %v450 = vadd.f32 %v298, %v449
        %451 = vmatmul.f32.gmra.mxu0 %v248
        %v452 = vpop.f32.mrf.mxu0
        %v453 = vadd.f32 %v303, %v452
        %454 = vmatmul.f32.gmra.mxu0 %v249
        %v455 = vpop.f32.mrf.mxu0
        %v456 = vadd.f32 %v308, %v455
        %457 = vmatmul.f32.gmra.mxu0 %v250
        %v458 = vpop.f32.mrf.mxu0
        %v459 = vadd.f32 %v313, %v458
        %460 = vmatmul.f32.gmra.mxu0 %v251
        %v461 = vpop.f32.mrf.mxu0
        %v462 = vadd.f32 %v318, %v461
        %463 = vmatmul.f32.gmra.mxu0 %v252
        %v464 = vpop.f32.mrf.mxu0
        %v465 = vadd.f32 %v323, %v464
        %466 = vmatmul.f32.gmra.mxu0 %v253
        %v467 = vpop.f32.mrf.mxu0
        %v468 = vadd.f32 %v328, %v467
        %469 = vmatmul.f32.gmra.mxu0 %v254
        %v470 = vpop.f32.mrf.mxu0
        %v471 = vadd.f32 %v333, %v470
        %472 = vmatmul.f32.gmra.mxu0 %v255
        %v473 = vpop.f32.mrf.mxu0
        %v474 = vadd.f32 %v338, %v473
        %475 = vmatmul.f32.gmra.mxu0 %v256
        %v476 = vpop.f32.mrf.mxu0
        %v477 = vadd.f32 %v343, %v476
        %478 = vmatmul.f32.gmra.mxu0 %v257
        %v479 = vpop.f32.mrf.mxu0
        %v480 = vadd.f32 %v348, %v479
        %481 = vmatmul.f32.gmra.mxu0 %v258
        %v482 = vpop.f32.mrf.mxu0
        %v483 = vadd.f32 %v353, %v482
        %484 = vdwg.mxu0
        %485 = vst [vmem:[%s208] sm:$0xff] %v373
        %486 = vst [vmem:[%s208 + $0x8] sm:$0xff] %v438
        %487 = vst [vmem:[%s208 + $0x10] sm:$0xff] %v376
        %488 = vst [vmem:[%s208 + $0x18] sm:$0xff] %v441
        %489 = vst [vmem:[%s208 + $0x20] sm:$0xff] %v379
        %490 = vst [vmem:[%s208 + $0x28] sm:$0xff] %v444
        %491 = vst [vmem:[%s208 + $0x30] sm:$0xff] %v382
        %492 = vst [vmem:[%s208 + $0x38] sm:$0xff] %v447
        %493 = vst [vmem:[%s208 + $0x40] sm:$0xff] %v385
        %494 = vst [vmem:[%s208 + $0x48] sm:$0xff] %v450
        %495 = vst [vmem:[%s208 + $0x50] sm:$0xff] %v388
        %496 = vst [vmem:[%s208 + $0x58] sm:$0xff] %v453
        %497 = vst [vmem:[%s208 + $0x60] sm:$0xff] %v391
        %498 = vst [vmem:[%s208 + $0x68] sm:$0xff] %v456
        %499 = vst [vmem:[%s208 + $0x70] sm:$0xff] %v394
        %500 = vst [vmem:[%s208 + $0x78] sm:$0xff] %v459
        %501 = vst [vmem:[%s208 + $0x80] sm:$0xff] %v397
        %502 = vst [vmem:[%s208 + $0x88] sm:$0xff] %v462
        %503 = vst [vmem:[%s208 + $0x90] sm:$0xff] %v400
        %504 = vst [vmem:[%s208 + $0x98] sm:$0xff] %v465
        %505 = vst [vmem:[%s208 + $0xa0] sm:$0xff] %v403
        %506 = vst [vmem:[%s208 + $0xa8] sm:$0xff] %v468
        %507 = vst [vmem:[%s208 + $0xb0] sm:$0xff] %v406
        %508 = vst [vmem:[%s208 + $0xb8] sm:$0xff] %v471
        %509 = vst [vmem:[%s208 + $0xc0] sm:$0xff] %v409
        %510 = vst [vmem:[%s208 + $0xc8] sm:$0xff] %v474
        %511 = vst [vmem:[%s208 + $0xd0] sm:$0xff] %v412
        %512 = vst [vmem:[%s208 + $0xd8] sm:$0xff] %v477
        %513 = vst [vmem:[%s208 + $0xe0] sm:$0xff] %v415
        %514 = vst [vmem:[%s208 + $0xe8] sm:$0xff] %v480
        %515 = vst [vmem:[%s208 + $0xf0] sm:$0xff] %v418
        %516 = vst [vmem:[%s208 + $0xf8] sm:$0xff] %v483
        %s517 = sand.u32 %s112, 1
        %s518 = scalar_lea.sflag [#allocation4], %s517
        %s519 = sand.u32 %s112, 1
        %s520 = smul.addr %s519, 256
        %s521 = scalar_lea.vmem [#allocation5], %s520
        // Predicated region
        $region37: #{tpu_custom_call.1} parent=31 // pred_check
          %p522 = pneg %p122
        $region38: #{tpu_custom_call.1} parent=31 // pred_check_branch
          %524 = sbr.rel (%p522) target = $region40
        $region39: #{tpu_custom_call.1} parent=31 // pred_region
          %s525 = smul.u32 2, %s25
          %527 = vsyncadd %s518, 0
          %s528 = smul.addr %s24, 64
          %s529 = sadd.s32 %s525, %s528
          %s530 = smul.addr %s529, 8
          %s531 = scalar_lea.hbm %s3, %s530
          %s532 = sshll.u32 %s521, 4
          %s533 = int_to_ptr.vmem [resolvable:$true] %s532
          %s534 = sshll.u32 %s531, 4
          %s535 = int_to_ptr.hbm [resolvable:$true] %s534
          %540 = dma.vmem_to_hbm [thread:$0]  %s533, 4096, %s535, %s518, 256, 512, 16
        $region40: #{tpu_custom_call.1} parent=31 // pred_fallthru
          _
      $region32: #{tpu_custom_call.1} parent=5 // pred_fallthru
        _
      %p541 = scmp.le.s32.totalorder 2, %s15
      // Predicated region
      $region41: #{tpu_custom_call.1} parent=5 // pred_check
        %p542 = pneg %p541
      $region42: #{tpu_custom_call.1} parent=5 // pred_check_branch
        %544 = sbr.rel (%p542) target = $region44
      $region43: #{tpu_custom_call.1} parent=5 // pred_region
        %s545 = ssub.s32 %s15, 2
        // Predicated region
        $region45: #{tpu_custom_call.1} parent=43 // pred_check
          %p546 = pneg %p128
        $region46: #{tpu_custom_call.1} parent=43 // pred_check_branch
          %548 = sbr.rel (%p546) target = $region48
        $region47: #{tpu_custom_call.1} parent=43 // pred_region
          %s549 = sand.u32 %s113, 1
          %s550 = scalar_lea.sflag [#allocation4], %s549
          %s551 = sand.u32 %s113, 1
          %s552 = smul.addr %s551, 256
          %s553 = scalar_lea.vmem [#allocation5], %s552
          %555 = dma.done %s550, 4096
        $region48: #{tpu_custom_call.1} parent=43 // pred_fallthru
          _
      $region44: #{tpu_custom_call.1} parent=5 // pred_fallthru
        _
    $region6: #{tpu_custom_call.1} parent=1 // loop_footer
      %s19 = sadd.s32 1, %s15
    $region7: #{tpu_custom_call.1} parent=1 // loop_footer_branch
      %14 = sbr.rel target = $region3
    $region8: #{tpu_custom_call.1} parent=1 // loop_exit
      _
    %556 = vsyncpa [#allocation3], 1
    %s557 = scalar_lea.sflag [#allocation3], 1
    %558 = vsyncpa %s557, 1
    %559 = vsyncpa [#allocation4], 1
    %s560 = scalar_lea.sflag [#allocation4], 1
    %561 = vsyncpa %s560, 1

</llo_original>
